<compile_context>
chip_gen: v5e
topology: v5e:2x2
jax: 0.10.0
libtpu: 0.0.40
codegen_flags: <defaults>
</compile_context>

<pallas_src>
import numpy as np
import jax
import jax.numpy as jnp
from jax.experimental import pallas as pl
from jax.experimental.pallas import tpu as pltpu

# ---------------- configuration (small synthetic shapes) ----------------
B, C = 2, 3                      # batch, RGB channels
IMG_H, IMG_W = 14, 14            # raw input image (pre-padding)
PAD_SIZE = 16                    # image_encoder.img_size == cfg.img_size
PATCH = 8                        # patch-embed stride
EMBED_DIM = 128                  # ViT embedding dim (lane-dense)
NUM_MASKS = 1
GH = GW = PAD_SIZE // PATCH      # embedding grid (2, 2)
TOKENS = GH * GW                 # tokens per image (4)
LOW_RES = 8                      # decoder low-res mask side
PATCH_FEATS = C * PATCH * PATCH              # 192
LOW_FEATS = NUM_MASKS * LOW_RES * LOW_RES    # 64
MASK_FEATS = NUM_MASKS * PAD_SIZE * PAD_SIZE  # 256 (lane-dense output width)

PIXEL_MEAN = np.array([123.675, 116.28, 103.53], np.float32)
PIXEL_STD = np.array([58.395, 57.12, 57.375], np.float32)


# ---------------- the fused Pallas kernel ----------------
def _make_fused_kernel(write_feats: bool):
    def kernel(patches_ref, w_embed_ref, b_embed_ref,
               w_decode_ref, b_decode_ref, *out_refs):
        # ---- preprocess + patch embed, folded into one GEMM ----
        # emb = ((x - mean)/std * valid) @ W_patch + b_patch
        #     == x @ (diag(1/std) @ W_patch) + Bias_embed          (exact)
        emb = jnp.dot(patches_ref[...].astype(jnp.bfloat16), w_embed_ref[...],
                      preferred_element_type=jnp.float32) + b_embed_ref[...]  # (B*T, D) f32

        if write_feats:
            out_refs[0][...] = emb                                             # feats

        # ---- token pooling as a sublane reduction (no pool matmul) ----
        pooled = jnp.concatenate(
            [jnp.sum(emb[b * TOKENS:(b + 1) * TOKENS, :], axis=0, keepdims=True)
             for b in range(B)],
            axis=0)                                                            # (B, D) f32

        # ---- decoder + dense-PE + bilinear upsample, folded into one GEMM ----
        # masks = (pooled + pe_sum) @ W_dec @ K_bilinear + b_dec @ K_bilinear
        #       == pooled @ W_decode + Bias_decode      (linear stand-in only)
        out_refs[-1][...] = jnp.dot(pooled.astype(jnp.bfloat16), w_decode_ref[...],
                                    preferred_element_type=jnp.float32) + b_decode_ref[...]
    return kernel


def _build_fused_call(write_feats: bool):
    flops = 2 * (B * TOKENS) * PATCH_FEATS * EMBED_DIM + 2 * B * EMBED_DIM * MASK_FEATS
    in_bytes = (4 * B * TOKENS * PATCH_FEATS          # patches f32
                + 2 * PATCH_FEATS * EMBED_DIM         # W' bf16
                + 4 * B * TOKENS * EMBED_DIM          # Bias_embed f32
                + 2 * EMBED_DIM * MASK_FEATS          # W_decode bf16
                + 4 * MASK_FEATS)                     # Bias_decode f32
    out_bytes = 4 * B * MASK_FEATS + (4 * B * TOKENS * EMBED_DIM if write_feats else 0)

    if write_feats:
        out_shape = (jax.ShapeDtypeStruct((B * TOKENS, EMBED_DIM), jnp.float32),  # feats
                     jax.ShapeDtypeStruct((B, MASK_FEATS), jnp.float32))          # masks
        out_specs = (pl.BlockSpec(memory_space=pltpu.MemorySpace.VMEM),
                     pl.BlockSpec(memory_space=pltpu.MemorySpace.VMEM))
    else:
        out_shape = jax.ShapeDtypeStruct((B, MASK_FEATS), jnp.float32)
        out_specs = pl.BlockSpec(memory_space=pltpu.MemorySpace.VMEM)

    return pl.pallas_call(
        _make_fused_kernel(write_feats),
        out_shape=out_shape,
        in_specs=[pl.BlockSpec(memory_space=pltpu.MemorySpace.VMEM)] * 5,
        out_specs=out_specs,
        cost_estimate=pl.CostEstimate(flops=flops, transcendentals=0,
                                      bytes_accessed=in_bytes + out_bytes),
    )


_SAM_FUSED = {True: _build_fused_call(True), False: _build_fused_call(False)}


# ---------------- host-side constants & folds (glue, computed once) ----------------
def bilinear_matrix(out_size, in_size):
    """PyTorch F.interpolate(mode='bilinear', align_corners=False) 1-D weights."""
    scale = in_size / out_size
    i = np.arange(out_size)
    src = np.clip((i + 0.5) * scale - 0.5, 0.0, None)
    i0 = np.minimum(np.floor(src).astype(np.int64), in_size - 1)
    i1 = np.minimum(i0 + 1, in_size - 1)
    w1 = src - i0
    w0 = 1.0 - w1
    m = np.zeros((out_size, in_size), np.float32)
    m[np.arange(out_size), i0] += w0
    m[np.arange(out_size), i1] += w1
    return m


def bilinear_kron(out_size, in_size):
    """K[i*in+j, y*out+x] = L[y,i]*L[x,j]  ->  separable bilinear as one GEMM."""
    L = bilinear_matrix(out_size, in_size)
    return np.kron(L, L).T.astype(np.float32)            # (in*in, out*out)


def valid_patch_mask():
    """1.0 where the padded-square pixel comes from the real image, im2col layout."""
    ys = (np.arange(GH)[:, None] * PATCH + np.arange(PATCH)[None, :]) < IMG_H
    xs = (np.arange(GW)[:, None] * PATCH + np.arange(PATCH)[None, :]) < IMG_W
    v = ys[:, None, :, None] & xs[None, :, None, :]                 # (GH,GW,P,P)
    v = np.broadcast_to(v[None, :, :, None, :, :], (B, GH, GW, C, PATCH, PATCH))
    return np.ascontiguousarray(v).reshape(B * TOKENS, PATCH_FEATS).astype(np.float32)


def dense_positional_encoding(gh, gw, dim, key):
    """PromptEncoder.get_dense_pe() style random-Fourier PE, (gh*gw, dim)."""
    g = jax.random.normal(key, (2, dim // 2), jnp.float32)
    ys = (jnp.arange(gh, dtype=jnp.float32) + 0.5) / gh
    xs = (jnp.arange(gw, dtype=jnp.float32) + 0.5) / gw
    coords = jnp.stack(jnp.meshgrid(ys, xs, indexing="ij"), axis=-1)
    proj = (2.0 * coords - 1.0) @ g
    pe = jnp.concatenate([jnp.sin(2 * jnp.pi * proj), jnp.cos(2 * jnp.pi * proj)], -1)
    return pe.reshape(gh * gw, dim)


def init_params(key):
    k_patch, k_dec, k_pe = jax.random.split(key, 3)
    mean_cols = jnp.asarray(np.repeat(PIXEL_MEAN, PATCH * PATCH)[None, :])              # (1,192)
    inv_std_cols = jnp.asarray((1.0 / np.repeat(PIXEL_STD, PATCH * PATCH))[None, :])    # (1,192)
    valid = jnp.asarray(valid_patch_mask())                                             # (8,192)
    w_patch = 0.02 * jax.random.normal(k_patch, (PATCH_FEATS, EMBED_DIM), jnp.float32)
    b_patch = jnp.zeros((1, EMBED_DIM), jnp.float32)
    dense_pe = dense_positional_encoding(GH, GW, EMBED_DIM, k_pe)                       # (4,128)
    w_dec = 0.02 * jax.random.normal(k_dec, (EMBED_DIM, LOW_FEATS), jnp.float32)
    b_dec = jnp.zeros((1, LOW_FEATS), jnp.float32)
    k_bilinear = jnp.asarray(bilinear_kron(PAD_SIZE, LOW_RES))                          # (64,256)

    # ---- host-side folds (exact for the linear stand-ins) ----
    w_embed = (inv_std_cols.reshape(PATCH_FEATS, 1) * w_patch).astype(jnp.bfloat16)     # (192,128)
    b_embed = b_patch - (mean_cols * inv_std_cols * valid) @ w_patch                    # (8,128) f32
    pe_sum = jnp.sum(dense_pe, axis=0, keepdims=True)                                   # (1,128)
    w_decode = (w_dec @ k_bilinear).astype(jnp.bfloat16)                                # (128,256)
    b_decode = (pe_sum @ w_dec + b_dec) @ k_bilinear                                    # (1,256) f32

    fused = {"w_embed": w_embed, "b_embed": b_embed,
             "w_decode": w_decode, "b_decode": b_decode}
    raw = {"mean_cols": mean_cols, "inv_std_cols": inv_std_cols, "valid": valid,
           "w_patch": w_patch, "b_patch": b_patch, "dense_pe": dense_pe,
           "w_dec": w_dec, "b_dec": b_dec, "k_bilinear": k_bilinear}
    return fused, raw


# ---------------- SAM_Iter_Simple.forward (forward_train) ----------------
def _im2col(image):
    """Pad to the square encoder size and im2col -> (B*TOKENS, C*P*P). Pure layout."""
    xp = jnp.pad(image, ((0, 0), (0, 0), (0, PAD_SIZE - IMG_H), (0, PAD_SIZE - IMG_W)))
    p = xp.reshape(B, C, GH, PATCH, GW, PATCH).transpose(0, 2, 4, 1, 3, 5)
    return p.reshape(B * TOKENS, PATCH_FEATS)


def sam_iter_simple_forward(image, params, require_embed=False):
    patches = _im2col(image)
    call = _SAM_FUSED[require_embed]
    if require_embed:
        feats, masks_flat = call(patches, params["w_embed"], params["b_embed"],
                                 params["w_decode"], params["b_decode"])
    else:
        masks_flat = call(patches, params["w_embed"], params["b_embed"],
                          params["w_decode"], params["b_decode"])
        feats = None

    high_res_logits = masks_flat.reshape(B, NUM_MASKS, PAD_SIZE, PAD_SIZE)
    outputs = {
        "masks": high_res_logits,
        "iou_predictions": None,
        "high_res_logits_list": [high_res_logits],
    }
    if require_embed:
        outputs["feats"] = feats
    return outputs


# ---------------- pure-JAX unfused reference (for correctness check only) ----------------
def reference_forward(image, raw):
    patches = _im2col(image)
    norm = (patches - raw["mean_cols"]) * raw["inv_std_cols"] * raw["valid"]
    emb = norm @ raw["w_patch"] + raw["b_patch"]
    pooled = emb.reshape(B, TOKENS, EMBED_DIM).sum(axis=1) \
        + jnp.sum(raw["dense_pe"], axis=0, keepdims=True)
    low = pooled @ raw["w_dec"] + raw["b_dec"]
    masks = (low @ raw["k_bilinear"]).reshape(B, NUM_MASKS, PAD_SIZE, PAD_SIZE)
    return emb, masks


if __name__ == "__main__":
    key = jax.random.PRNGKey(0)
    k_img, k_params = jax.random.split(key)
    image = jax.random.uniform(k_img, (B, C, IMG_H, IMG_W), jnp.float32, 0.0, 255.0)
    params, raw = init_params(k_params)

    fwd = jax.jit(sam_iter_simple_forward, static_argnames=("require_embed",))

    # require_embed=True path (feats written)
    out = fwd(image, params, require_embed=True)
    masks = jax.block_until_ready(out["masks"])
    feats = jax.block_until_ready(out["feats"])

    # require_embed=False path (no feats output declared)
    out_nf = fwd(image, params, require_embed=False)
    masks_nf = jax.block_until_ready(out_nf["masks"])

    assert masks.shape == (B, NUM_MASKS, PAD_SIZE, PAD_SIZE)
    assert out["high_res_logits_list"][-1].shape == (B, NUM_MASKS, PAD_SIZE, PAD_SIZE)
    assert feats.shape == (B * TOKENS, EMBED_DIM)
    assert masks_nf.shape == (B, NUM_MASKS, PAD_SIZE, PAD_SIZE)
    assert bool(jnp.all(jnp.isfinite(masks)))
    assert bool(jnp.all(jnp.isfinite(feats)))

    # correctness vs unfused f32 reference (tolerance covers bf16 MXU operands)
    ref_emb, ref_masks = reference_forward(image, raw)
    assert bool(jnp.allclose(feats, ref_emb, atol=0.1, rtol=0.05)), "feats mismatch"
    assert bool(jnp.allclose(masks, ref_masks, atol=0.1, rtol=0.05)), "masks mismatch"
    assert bool(jnp.allclose(masks_nf, ref_masks, atol=0.1, rtol=0.05)), "masks (no-embed) mismatch"

    print("KERNEL_OK")
</pallas_src>

<mosaic_0001>
module attributes {stable_mosaic.version = 11 : i64} {
  func.func @kernel(%arg0: memref<8x192xf32, #tpu.memory_space<vmem>>, %arg1: memref<192x128xbf16, #tpu.memory_space<vmem>>, %arg2: memref<8x128xf32, #tpu.memory_space<vmem>>, %arg3: memref<128x256xbf16, #tpu.memory_space<vmem>>, %arg4: memref<1x256xf32, #tpu.memory_space<vmem>>, %arg5: memref<8x128xf32, #tpu.memory_space<vmem>>, %arg6: memref<2x256xf32, #tpu.memory_space<vmem>>) attributes {dimension_semantics = [], scalar_prefetch = 0 : i64, scratch_operands = 0 : i64, tpu.core_type = #tpu.core_type<tc>} {
    %c0 = arith.constant 0 : index
    %c0_0 = arith.constant 0 : index
    %0 = vector.load %arg0[%c0, %c0_0] : memref<8x192xf32, #tpu.memory_space<vmem>>, vector<8x192xf32>
    %1 = arith.truncf %0 : vector<8x192xf32> to vector<8x192xbf16>
    %c0_1 = arith.constant 0 : index
    %c0_2 = arith.constant 0 : index
    %2 = vector.load %arg1[%c0_1, %c0_2] : memref<192x128xbf16, #tpu.memory_space<vmem>>, vector<192x128xbf16>
    %cst = arith.constant dense<0.000000e+00> : vector<8x128xf32>
    %3 = tpu.matmul %1, %2, %cst {dimension_numbers = #tpu.dot_dimension_numbers<[1], [0], [0], [1], [0, 0, 1, 1], [], []>} : vector<8x192xbf16>, vector<192x128xbf16>, vector<8x128xf32> -> vector<8x128xf32>
    %c0_3 = arith.constant 0 : index
    %c0_4 = arith.constant 0 : index
    %4 = vector.load %arg2[%c0_3, %c0_4] : memref<8x128xf32, #tpu.memory_space<vmem>>, vector<8x128xf32>
    %5 = arith.addf %3, %4 : vector<8x128xf32>
    %c0_5 = arith.constant 0 : index
    %c0_6 = arith.constant 0 : index
    %6 = vector.load %arg5[%c0_5, %c0_6] : memref<8x128xf32, #tpu.memory_space<vmem>>, vector<8x128xf32>
    tpu.vector_store %arg5[%c0_5, %c0_6], %5 {strides = array<i32>} : memref<8x128xf32, #tpu.memory_space<vmem>>, vector<8x128xf32>,
    %7 = vector.extract_strided_slice %5 {offsets = [0, 0], sizes = [4, 128], strides = [1, 1]} : vector<8x128xf32> to vector<4x128xf32>
    %cst_7 = arith.constant dense<0.000000e+00> : vector<128xf32>
    %8 = vector.multi_reduction <add>, %7, %cst_7 [0] : vector<4x128xf32> to vector<128xf32>
    %9 = vector.shape_cast %8 : vector<128xf32> to vector<1x128xf32>
    %10 = vector.extract_strided_slice %5 {offsets = [4, 0], sizes = [4, 128], strides = [1, 1]} : vector<8x128xf32> to vector<4x128xf32>
    %cst_8 = arith.constant dense<0.000000e+00> : vector<128xf32>
    %11 = vector.multi_reduction <add>, %10, %cst_8 [0] : vector<4x128xf32> to vector<128xf32>
    %12 = vector.shape_cast %11 : vector<128xf32> to vector<1x128xf32>
    %13 = tpu.concatenate %9, %12 in 0 : vector<1x128xf32>, vector<1x128xf32> -> vector<2x128xf32>
    %14 = arith.truncf %13 : vector<2x128xf32> to vector<2x128xbf16>
    %c0_9 = arith.constant 0 : index
    %c0_10 = arith.constant 0 : index
    %15 = vector.load %arg3[%c0_9, %c0_10] : memref<128x256xbf16, #tpu.memory_space<vmem>>, vector<128x256xbf16>
    %cst_11 = arith.constant dense<0.000000e+00> : vector<2x256xf32>
    %16 = tpu.matmul %14, %15, %cst_11 {dimension_numbers = #tpu.dot_dimension_numbers<[1], [0], [0], [1], [0, 0, 1, 1], [], []>} : vector<2x128xbf16>, vector<128x256xbf16>, vector<2x256xf32> -> vector<2x256xf32>
    %c0_12 = arith.constant 0 : index
    %c0_13 = arith.constant 0 : index
    %17 = vector.load %arg4[%c0_12, %c0_13] : memref<1x256xf32, #tpu.memory_space<vmem>>, vector<1x256xf32>
    %18 = vector.broadcast %17 : vector<1x256xf32> to vector<2x256xf32>
    %19 = arith.addf %16, %18 : vector<2x256xf32>
    %c0_14 = arith.constant 0 : index
    %c0_15 = arith.constant 0 : index
    %20 = vector.load %arg6[%c0_14, %c0_15] : memref<2x256xf32, #tpu.memory_space<vmem>>, vector<2x256xf32>
    tpu.vector_store %arg6[%c0_14, %c0_15], %19 {strides = array<i32>} : memref<2x256xf32, #tpu.memory_space<vmem>>, vector<2x256xf32>,
    return
  }
}

</mosaic_0001>

<llo_original>
// kernel: sam_iter_simple_forward.1
$region0: #{sam_iter_simple_forward.1}
  #allocation0 [shape = 'u32[]', space=smem, size = 0x4, offset = 0x4, fixed_abs, tag = 'smem constant byte address 0x4 - core index']
  #allocation1 [shape = 'u32[72,128]{1,0:T(1,128)}', space=vmem, size = 0x9000, scoped, tag = 'internal scratch']
  %s0 = inlined_call_operand.vmem [shape: f32[8,192], index: 0, kind: input, shape index: {}]
  %s1 = inlined_call_operand.vmem [shape: bf16[192,128], index: 1, kind: input, shape index: {}]
  %s2 = inlined_call_operand.vmem [shape: f32[8,128], index: 2, kind: input, shape index: {}]
  %s3 = inlined_call_operand.vmem [shape: bf16[128,256], index: 3, kind: input, shape index: {}]
  %s4 = inlined_call_operand.vmem [shape: f32[1,256], index: 4, kind: input, shape index: {}]
  %s5 = inlined_call_operand.hbm [shape: f32[8,128], index: 5, kind: output, shape index: {0}]
  %s6 = inlined_call_operand.vmem [shape: f32[2,256], index: 6, kind: output, shape index: {1}]
  %7 = xla_tuple %s5, %s6
  %s8 = sld [smem:[#allocation0]]
  $region38: #{sam_iter_simple_forward.1} parent=0
    _
  %s10 = ssub.s32 1, %s8
  %s11 = scalar_select 0, %s10, %s8
  $region1: #{sam_iter_simple_forward.1} parent=0
    #allocation2 [shape = 'u8[4096]{0}', space=vmem, size = 0x1000, scoped, tag = 'output window, operand 0, single buffered']
    #allocation3 [shape = 's32[1]{0}', space=sflag, size = 0x4, scoped, tag = 'scoped memory for sam_iter_simple_forward.1']
    %12 = vsyncpa [#allocation3], 0
    // Predicated region
    $region2: #{sam_iter_simple_forward.1} parent=1 // pred_check
      _
    $region3: #{sam_iter_simple_forward.1} parent=1 // pred_check_branch
      %14 = sbr.rel (0) target = $region5
    $region4: #{sam_iter_simple_forward.1} parent=1 // pred_region
      _
    $region5: #{sam_iter_simple_forward.1} parent=1 // pred_fallthru
      _
    // Predicated region
    $region6: #{sam_iter_simple_forward.1} parent=1 // pred_check
      _
    $region7: #{sam_iter_simple_forward.1} parent=1 // pred_check_branch
      %16 = sbr.rel (0) target = $region9
    $region8: #{sam_iter_simple_forward.1} parent=1 // pred_region
      _
    $region9: #{sam_iter_simple_forward.1} parent=1 // pred_fallthru
      _
    // Predicated region
    $region10: #{sam_iter_simple_forward.1} parent=1 // pred_check
      _
    $region11: #{sam_iter_simple_forward.1} parent=1 // pred_check_branch
      %18 = sbr.rel (0) target = $region13
    $region12: #{sam_iter_simple_forward.1} parent=1 // pred_region
      _
    $region13: #{sam_iter_simple_forward.1} parent=1 // pred_fallthru
      _
    // Predicated region
    $region14: #{sam_iter_simple_forward.1} parent=1 // pred_check
      _
    $region15: #{sam_iter_simple_forward.1} parent=1 // pred_check_branch
      %20 = sbr.rel (0) target = $region17
    $region16: #{sam_iter_simple_forward.1} parent=1 // pred_region
      _
    $region17: #{sam_iter_simple_forward.1} parent=1 // pred_fallthru
      _
    // Predicated region
    $region18: #{sam_iter_simple_forward.1} parent=1 // pred_check
      _
    $region19: #{sam_iter_simple_forward.1} parent=1 // pred_check_branch
      %22 = sbr.rel (0) target = $region21
    $region20: #{sam_iter_simple_forward.1} parent=1 // pred_region
      _
    $region21: #{sam_iter_simple_forward.1} parent=1 // pred_fallthru
      _
    %v24 = vld [vmem:[%s0] sm:$0xff]
    %v25 = vld [vmem:[%s0 + $0x8] sm:$0xff]
    %v26 = vpack.c.bf16 %v24, %v24
    %v27 = vpack.c.bf16 %v25, %v25
    %v28 = vld [vmem:[%s1] sm:$0xf]
    %v29 = vld [vmem:[%s1 + $0x4] sm:$0xf]
    %v30 = vld [vmem:[%s1 + $0x8] sm:$0xf]
    %v31 = vld [vmem:[%s1 + $0xc] sm:$0xf]
    %v32 = vld [vmem:[%s1 + $0x10] sm:$0xf]
    %v33 = vld [vmem:[%s1 + $0x14] sm:$0xf]
    %v34 = vld [vmem:[%s1 + $0x18] sm:$0xf]
    %v35 = vld [vmem:[%s1 + $0x1c] sm:$0xf]
    %v36 = vld [vmem:[%s1 + $0x20] sm:$0xf]
    %v37 = vld [vmem:[%s1 + $0x24] sm:$0xf]
    %v38 = vld [vmem:[%s1 + $0x28] sm:$0xf]
    %v39 = vld [vmem:[%s1 + $0x2c] sm:$0xf]
    %v40 = vld [vmem:[%s1 + $0x30] sm:$0xf]
    %v41 = vld [vmem:[%s1 + $0x34] sm:$0xf]
    %v42 = vld [vmem:[%s1 + $0x38] sm:$0xf]
    %v43 = vld [vmem:[%s1 + $0x3c] sm:$0xf]
    %v44 = vld [vmem:[%s1 + $0x40] sm:$0xf]
    %v45 = vld [vmem:[%s1 + $0x44] sm:$0xf]
    %v46 = vld [vmem:[%s1 + $0x48] sm:$0xf]
    %v47 = vld [vmem:[%s1 + $0x4c] sm:$0xf]
    %v48 = vld [vmem:[%s1 + $0x50] sm:$0xf]
    %v49 = vld [vmem:[%s1 + $0x54] sm:$0xf]
    %v50 = vld [vmem:[%s1 + $0x58] sm:$0xf]
    %v51 = vld [vmem:[%s1 + $0x5c] sm:$0xf]
    %v52 = vld [vmem:[%s2] sm:$0xff]
    %v77 = vunpack.c.l.b16 %v28
    %v78 = vunpack.c.l.b16 %v29
    %v79 = vunpack.c.l.b16 %v30
    %v80 = vunpack.c.l.b16 %v31
    %v81 = vunpack.c.l.b16 %v32
    %v82 = vunpack.c.l.b16 %v33
    %v83 = vunpack.c.l.b16 %v34
    %v84 = vunpack.c.l.b16 %v35
    %v85 = vunpack.c.l.b16 %v36
    %v86 = vunpack.c.l.b16 %v37
    %v87 = vunpack.c.l.b16 %v38
    %v88 = vunpack.c.l.b16 %v39
    %v89 = vunpack.c.l.b16 %v40
    %v90 = vunpack.c.l.b16 %v41
    %v91 = vunpack.c.l.b16 %v42
    %v92 = vunpack.c.l.b16 %v43
    %v93 = vunpack.c.l.b16 %v44
    %v94 = vunpack.c.l.b16 %v45
    %v95 = vunpack.c.l.b16 %v46
    %v96 = vunpack.c.l.b16 %v47
    %v97 = vunpack.c.l.b16 %v48
    %v98 = vunpack.c.l.b16 %v49
    %v99 = vunpack.c.l.b16 %v50
    %v100 = vunpack.c.l.b16 %v51
    %v101 = vpack.c.b16 %v78, %v77
    %v102 = vpack.c.b16 %v80, %v79
    %v103 = vpack.c.b16 %v82, %v81
    %v104 = vpack.c.b16 %v84, %v83
    %v105 = vpack.c.b16 %v86, %v85
    %v106 = vpack.c.b16 %v88, %v87
    %v107 = vpack.c.b16 %v90, %v89
    %v108 = vpack.c.b16 %v92, %v91
    %v109 = vpack.c.b16 %v94, %v93
    %v110 = vpack.c.b16 %v96, %v95
    %v111 = vpack.c.b16 %v98, %v97
    %v112 = vpack.c.b16 %v100, %v99
    %vm125 = vcmask 523264
    %v127 = vsel %vm125, %v27, 0
    %129 = vmatpush.bf16.msra.mxu0 %v108
    %130 = vmatpush.bf16.msra.mxu0 %v107
    %131 = vmatpush.bf16.msra.mxu0 %v106
    %132 = vmatpush.bf16.msra.mxu0 %v105
    %133 = vmatpush.bf16.msra.mxu0 %v104
    %134 = vmatpush.bf16.msra.mxu0 %v103
    %135 = vmatpush.bf16.msra.mxu0 %v102
    %136 = vmatpush.bf16.msra.mxu0 %v101
    %137 = vmatmul.bf16.gmra.mxu0 %v26
    %v138 = vpop.f32.mrf.mxu0
    %v139 = vadd.f32 %v52, %v138
    %v140 = vpop.f32.mrf.mxu0
    %141 = vdwg.mxu0
    %142 = vmatpush.bf16.msra.mxu0 0
    %143 = vmatpush.bf16.msra.mxu0 0
    %144 = vmatpush.bf16.msra.mxu0 0
    %145 = vmatpush.bf16.msra.mxu0 0
    %146 = vmatpush.bf16.msra.mxu0 %v112
    %147 = vmatpush.bf16.msra.mxu0 %v111
    %148 = vmatpush.bf16.msra.mxu0 %v110
    %149 = vmatpush.bf16.msra.mxu0 %v109
    %150 = vmatmul.bf16.gmra.mxu0 %v127
    %v151 = vpop.f32.mrf.mxu0
    %v152 = vadd.f32 %v139, %v151
    %v153 = vpop.f32.mrf.mxu0
    %154 = vdwg.mxu0
    %155 = vst [vmem:[#allocation2] sm:$0xff] %v152
    %vm156 = vcmask 1043456
    %v157 = vsel %vm156, %v152, 0.0
    %v158 = vrot.slane %v157, 4
    %v159 = vadd.f32 %v157, %v158
    %v160 = vrot.slane %v159, 2
    %v161 = vadd.f32 %v159, %v160
    %v162 = vrot.slane %v161, 1
    %v163 = vadd.f32 %v161, %v162
    %v165 = vrot.slane %v152, 4
    %v167 = vsel %vm156, %v165, 0.0
    %v168 = vrot.slane %v167, 4
    %v169 = vadd.f32 %v167, %v168
    %v170 = vrot.slane %v169, 2
    %v171 = vadd.f32 %v169, %v170
    %v172 = vrot.slane %v171, 1
    %v173 = vadd.f32 %v171, %v172
    %vm174 = vcmask 1040384
    %v175 = vsel %vm174, %v163, %v173
    %v176 = vpack.c.bf16 %v175, %v175
    %v177 = vld [vmem:[%s3] sm:$0xff]
    %v178 = vld [vmem:[%s3 + $0x8] sm:$0xff]
    %v179 = vld [vmem:[%s3 + $0x10] sm:$0xff]
    %v180 = vld [vmem:[%s3 + $0x18] sm:$0xff]
    %v181 = vld [vmem:[%s3 + $0x20] sm:$0xff]
    %v182 = vld [vmem:[%s3 + $0x28] sm:$0xff]
    %v183 = vld [vmem:[%s3 + $0x30] sm:$0xff]
    %v184 = vld [vmem:[%s3 + $0x38] sm:$0xff]
    %v185 = vld [vmem:[%s3 + $0x40] sm:$0xff]
    %v186 = vld [vmem:[%s3 + $0x48] sm:$0xff]
    %v187 = vld [vmem:[%s3 + $0x50] sm:$0xff]
    %v188 = vld [vmem:[%s3 + $0x58] sm:$0xff]
    %v189 = vld [vmem:[%s3 + $0x60] sm:$0xff]
    %v190 = vld [vmem:[%s3 + $0x68] sm:$0xff]
    %v191 = vld [vmem:[%s3 + $0x70] sm:$0xff]
    %v192 = vld [vmem:[%s3 + $0x78] sm:$0xff]
    %v193 = vld [vmem:[%s4] sm:$0x3]
    %v195 = vperm.slane %v193, 0
    %v196 = vperm.slane %v193, 1
    %v215 = vunpack.c.l.b16 %v177
    %v216 = vunpack.c.h.b16 %v177
    %v217 = vunpack.c.l.b16 %v178
    %v218 = vunpack.c.h.b16 %v178
    %v219 = vunpack.c.l.b16 %v179
    %v220 = vunpack.c.h.b16 %v179
    %v221 = vunpack.c.l.b16 %v180
    %v222 = vunpack.c.h.b16 %v180
    %v223 = vunpack.c.l.b16 %v181
    %v224 = vunpack.c.h.b16 %v181
    %v225 = vunpack.c.l.b16 %v182
    %v226 = vunpack.c.h.b16 %v182
    %v227 = vunpack.c.l.b16 %v183
    %v228 = vunpack.c.h.b16 %v183
    %v229 = vunpack.c.l.b16 %v184
    %v230 = vunpack.c.h.b16 %v184
    %v231 = vunpack.c.l.b16 %v185
    %v232 = vunpack.c.h.b16 %v185
    %v233 = vunpack.c.l.b16 %v186
    %v234 = vunpack.c.h.b16 %v186
    %v235 = vunpack.c.l.b16 %v187
    %v236 = vunpack.c.h.b16 %v187
    %v237 = vunpack.c.l.b16 %v188
    %v238 = vunpack.c.h.b16 %v188
    %v239 = vunpack.c.l.b16 %v189
    %v240 = vunpack.c.h.b16 %v189
    %v241 = vunpack.c.l.b16 %v190
    %v242 = vunpack.c.h.b16 %v190
    %v243 = vunpack.c.l.b16 %v191
    %v244 = vunpack.c.h.b16 %v191
    %v245 = vunpack.c.l.b16 %v192
    %v246 = vunpack.c.h.b16 %v192
    %v247 = vpack.c.b16 %v217, %v215
    %v248 = vpack.c.b16 %v218, %v216
    %v249 = vpack.c.b16 %v221, %v219
    %v250 = vpack.c.b16 %v222, %v220
    %v251 = vpack.c.b16 %v225, %v223
    %v252 = vpack.c.b16 %v226, %v224
    %v253 = vpack.c.b16 %v229, %v227
    %v254 = vpack.c.b16 %v230, %v228
    %v255 = vpack.c.b16 %v233, %v231
    %v256 = vpack.c.b16 %v234, %v232
    %v257 = vpack.c.b16 %v237, %v235
    %v258 = vpack.c.b16 %v238, %v236
    %v259 = vpack.c.b16 %v241, %v239
    %v260 = vpack.c.b16 %v242, %v240
    %v261 = vpack.c.b16 %v245, %v243
    %v262 = vpack.c.b16 %v246, %v244
    %279 = vmatpush.bf16.msra.mxu0 %v261
    %280 = vmatpush.bf16.msra.mxu0 %v259
    %281 = vmatpush.bf16.msra.mxu0 %v257
    %282 = vmatpush.bf16.msra.mxu0 %v255
    %283 = vmatpush.bf16.msra.mxu0 %v253
    %284 = vmatpush.bf16.msra.mxu0 %v251
    %285 = vmatpush.bf16.msra.mxu0 %v249
    %286 = vmatpush.bf16.msra.mxu0 %v247
    %287 = vmatmul.bf16.gmra.mxu0 %v176
    %v288 = vpop.f32.mrf.mxu0
    %v289 = vadd.f32 %v195, %v288
    %v290 = vpop.f32.mrf.mxu0
    %291 = vdwg.mxu0
    %292 = vmatpush.bf16.msra.mxu0 %v262
    %293 = vmatpush.bf16.msra.mxu0 %v260
    %294 = vmatpush.bf16.msra.mxu0 %v258
    %295 = vmatpush.bf16.msra.mxu0 %v256
    %296 = vmatpush.bf16.msra.mxu0 %v254
    %297 = vmatpush.bf16.msra.mxu0 %v252
    %298 = vmatpush.bf16.msra.mxu0 %v250
    %299 = vmatpush.bf16.msra.mxu0 %v248
    %300 = vmatmul.bf16.gmra.mxu0 %v176
    %v301 = vpop.f32.mrf.mxu0
    %v302 = vadd.f32 %v196, %v301
    %v303 = vpop.f32.mrf.mxu0
    %304 = vdwg.mxu0
    %v307 = vrot.slane %v302, 6
    %vm308 = vcmask 1041408
    %v309 = vsel %vm308, %v289, %v307
    %311 = vst [vmem:[%s6] sm:$0xf] %v309
    // Predicated region
    $region22: #{sam_iter_simple_forward.1} parent=1 // pred_check
      _
    $region23: #{sam_iter_simple_forward.1} parent=1 // pred_check_branch
      %313 = sbr.rel (0) target = $region25
    $region24: #{sam_iter_simple_forward.1} parent=1 // pred_region
      %315 = vsyncadd [#allocation3], 0
      %s317 = sshll.u32 [#allocation2], 4
      %s318 = int_to_ptr.vmem [resolvable:$true] %s317
      %s319 = sshll.u32 %s5, 4
      %s320 = int_to_ptr.hbm [resolvable:$true] %s319
      %322 = dma.vmem_to_hbm [thread:$0]  %s318, 128, %s320, [#allocation3]
    $region25: #{sam_iter_simple_forward.1} parent=1 // pred_fallthru
      _
    // Predicated region
    $region26: #{sam_iter_simple_forward.1} parent=1 // pred_check
      _
    $region27: #{sam_iter_simple_forward.1} parent=1 // pred_check_branch
      %324 = sbr.rel (0) target = $region29
    $region28: #{sam_iter_simple_forward.1} parent=1 // pred_region
      _
    $region29: #{sam_iter_simple_forward.1} parent=1 // pred_fallthru
      _
    // Predicated region
    $region30: #{sam_iter_simple_forward.1} parent=1 // pred_check
      _
    $region31: #{sam_iter_simple_forward.1} parent=1 // pred_check_branch
      %326 = sbr.rel (0) target = $region33
    $region32: #{sam_iter_simple_forward.1} parent=1 // pred_region
      %328 = dma.done [#allocation3], 128
    $region33: #{sam_iter_simple_forward.1} parent=1 // pred_fallthru
      _
    // Predicated region
    $region34: #{sam_iter_simple_forward.1} parent=1 // pred_check
      _
    $region35: #{sam_iter_simple_forward.1} parent=1 // pred_check_branch
      %330 = sbr.rel (0) target = $region37
    $region36: #{sam_iter_simple_forward.1} parent=1 // pred_region
      _
    $region37: #{sam_iter_simple_forward.1} parent=1 // pred_fallthru
      _
    %331 = vsyncpa [#allocation3], 1

</llo_original>
